<compile_context>
chip_gen: v6e
topology: v6e:2x2x1
jax: 0.10.0
libtpu: 0.0.40
codegen_flags: <defaults>
</compile_context>

<pallas_src>
import functools

import jax
import jax.numpy as jnp
from jax import lax
from jax.experimental import pallas as pl
from jax.experimental.pallas import tpu as pltpu

_LANE = 128
_SUBLANE = 8
_BLOCK_ROWS = 4096  # 4096 x 128 f32 = 2 MiB per buffer (double-buffered by Pallas)


def _mix_bits(idx, seed):
    """Stateless per-element 32-bit hash (lowbias32 finalizer) of idx + seed.

    Pure vector integer ops (mul / xor / logical shift) -> runs on the VPU,
    in interpret mode, and in plain JAX for the ragged tail.
    """
    h = idx * jnp.uint32(0x9E3779B1) + seed * jnp.uint32(0x85EBCA77)
    h = h ^ (h >> 16)
    h = h * jnp.uint32(0x7FEB352D)
    h = h ^ (h >> 15)
    h = h * jnp.uint32(0x846CA68B)
    h = h ^ (h >> 16)
    return h


def _dropout_train_kernel(seed_ref, x_ref, o_ref, *, threshold, scale):
    rows, lanes = x_ref.shape
    # Global flat element index of every element in this tile.
    base = pl.program_id(0).astype(jnp.uint32) * jnp.uint32(rows)
    row_ids = lax.broadcasted_iota(jnp.int32, (rows, lanes), 0).astype(jnp.uint32)
    col_ids = lax.broadcasted_iota(jnp.int32, (rows, lanes), 1).astype(jnp.uint32)
    idx = (base + row_ids) * jnp.uint32(lanes) + col_ids

    seed = seed_ref[0].astype(jnp.uint32)
    bits = _mix_bits(idx, seed)
    # Drop with probability p via a direct integer threshold compare.
    drop = bits < jnp.uint32(threshold)

    x = x_ref[...]
    scale_c = jnp.asarray(scale, dtype=x_ref.dtype)  # stay in native dtype (bf16-safe)
    o_ref[...] = jnp.where(drop, jnp.zeros_like(x), x * scale_c)


def dropout(x, p=0.5, *, seed=0, training=True):
    """Pallas dropout matching the PyTorch module's forward pass."""
    if not training or p <= 0.0:
        return x
    if p >= 1.0:
        # PyTorch would divide by zero; the only consistent limit is all-zero.
        return jnp.zeros_like(x)

    orig_shape = x.shape
    n = x.size
    flat = x.reshape(-1)

    threshold = min(int(round(p * (1 << 32))), (1 << 32) - 1)
    scale = 1.0 / (1.0 - p)
    seed_arr = jnp.array([seed & 0x7FFFFFFF], dtype=jnp.int32)

    tile = _SUBLANE * _LANE  # 1024
    n_main = (n // tile) * tile

    out_parts = []

    if n_main:
        rows = n_main // _LANE  # multiple of 8
        x2d = flat[:n_main].reshape(rows, _LANE)

        if rows > _BLOCK_ROWS:
            block_rows = _BLOCK_ROWS
        else:
            # Small input: split into >=2 balanced blocks (multiple of 8 rows)
            # so v7x's two TensorCores both get grid steps.
            half = -(-(rows // 2) // _SUBLANE) * _SUBLANE
            block_rows = max(_SUBLANE, min(half, rows))
        grid = (pl.cdiv(rows, block_rows),)

        kernel = functools.partial(
            _dropout_train_kernel, threshold=threshold, scale=scale)

        out2d = pl.pallas_call(
            kernel,
            out_shape=jax.ShapeDtypeStruct((rows, _LANE), x.dtype),
            grid=grid,
            in_specs=[
                pl.BlockSpec(memory_space=pltpu.MemorySpace.SMEM),    # seed scalar
                pl.BlockSpec((block_rows, _LANE), lambda i: (i, 0)),  # input tile
            ],
            out_specs=pl.BlockSpec((block_rows, _LANE), lambda i: (i, 0)),
            compiler_params=pltpu.CompilerParams(
                dimension_semantics=("parallel",),
            ),
            cost_estimate=pl.CostEstimate(
                flops=n_main,
                transcendentals=0,
                bytes_accessed=2 * n_main * x.dtype.itemsize + 4,
            ),
        )(seed_arr, x2d)
        out_parts.append(out2d.reshape(-1))

    if n_main < n:
        # Ragged tail (< 1024 elements): same hash/threshold in plain JAX —
        # avoids the pad + slice full-array HBM round trip.
        tail = flat[n_main:]
        idx = jnp.arange(n_main, n, dtype=jnp.uint32)
        bits = _mix_bits(idx, jnp.uint32(seed & 0x7FFFFFFF))
        drop = bits < jnp.uint32(threshold)
        scale_c = jnp.asarray(scale, dtype=x.dtype)
        out_parts.append(jnp.where(drop, jnp.zeros_like(tail), tail * scale_c))

    out = out_parts[0] if len(out_parts) == 1 else jnp.concatenate(out_parts)
    return out.reshape(orig_shape)


if __name__ == "__main__":
    key = jax.random.PRNGKey(0)
    # NCHW input, like the PyTorch CNN this module sits in.
    x = jax.random.normal(key, (2, 4, 16, 16), dtype=jnp.float32)

    p = 0.5
    y_train = dropout(x, p=p, seed=42, training=True)
    y_train = jax.block_until_ready(y_train)

    # Sanity checks: every output is either exactly 0 or x/(1-p); eval is identity.
    scale = 1.0 / (1.0 - p)
    is_zero = jnp.isclose(y_train, 0.0)
    is_scaled = jnp.isclose(y_train, x * scale, rtol=1e-5, atol=1e-5)
    assert bool(jnp.all(is_zero | is_scaled)), "dropout output has unexpected values"
    frac_dropped = float(jnp.mean(is_zero & ~jnp.isclose(x, 0.0)))
    assert 0.3 < frac_dropped < 0.7, f"drop fraction {frac_dropped} far from p={p}"

    y_eval = dropout(x, p=p, training=False)
    y_eval = jax.block_until_ready(y_eval)
    assert bool(jnp.all(y_eval == x)), "eval-mode dropout must be identity"

    print("KERNEL_OK")
</pallas_src>

<mosaic_0001>
module attributes {stable_mosaic.version = 11 : i64} {
  func.func @_dropout_train_kernel(%arg0: i32, %arg1: memref<1xi32, #tpu.memory_space<smem>>, %arg2: memref<8x128xf32, #tpu.memory_space<vmem>>, %arg3: memref<8x128xf32, #tpu.memory_space<vmem>>) attributes {dimension_semantics = [#tpu.dimension_semantics<parallel>], iteration_bounds = array<i64: 2>, scalar_prefetch = 0 : i64, scratch_operands = 0 : i64, tpu.core_type = #tpu.core_type<tc>, window_params = [{transform_indices = @transform_0, window_bounds = array<i64: 1>}, {transform_indices = @transform_1, window_bounds = array<i64: 8, 128>}, {transform_indices = @transform_2, window_bounds = array<i64: 8, 128>}]} {
    %c8_i32 = arith.constant 8 : i32
    %0 = arith.muli %arg0, %c8_i32 : i32
    %1 = tpu.iota {dimensions = array<i32: 0>} : vector<8x128xi32>
    %2 = tpu.iota {dimensions = array<i32: 1>} : vector<8x128xi32>
    %3 = vector.broadcast %0 : i32 to vector<8x128xi32>
    %4 = arith.addi %3, %1 : vector<8x128xi32>
    %c128_i32 = arith.constant 128 : i32
    %5 = vector.broadcast %c128_i32 : i32 to vector<8x128xi32>
    %6 = arith.muli %4, %5 : vector<8x128xi32>
    %7 = arith.addi %6, %2 : vector<8x128xi32>
    %c0 = arith.constant 0 : index
    %8 = memref.load %arg1[%c0] : memref<1xi32, #tpu.memory_space<smem>>
    %c-1640531535_i32 = arith.constant -1640531535 : i32
    %9 = vector.broadcast %c-1640531535_i32 : i32 to vector<8x128xi32>
    %10 = arith.muli %7, %9 : vector<8x128xi32>
    %c-2048144777_i32 = arith.constant -2048144777 : i32
    %11 = arith.muli %8, %c-2048144777_i32 : i32
    %12 = vector.broadcast %11 : i32 to vector<8x128xi32>
    %13 = arith.addi %10, %12 : vector<8x128xi32>
    %c16_i32 = arith.constant 16 : i32
    %14 = vector.broadcast %c16_i32 : i32 to vector<8x128xi32>
    %15 = arith.shrui %13, %14 : vector<8x128xi32>
    %16 = arith.xori %13, %15 : vector<8x128xi32>
    %c2146121005_i32 = arith.constant 2146121005 : i32
    %17 = vector.broadcast %c2146121005_i32 : i32 to vector<8x128xi32>
    %18 = arith.muli %16, %17 : vector<8x128xi32>
    %c15_i32 = arith.constant 15 : i32
    %19 = vector.broadcast %c15_i32 : i32 to vector<8x128xi32>
    %20 = arith.shrui %18, %19 : vector<8x128xi32>
    %21 = arith.xori %18, %20 : vector<8x128xi32>
    %c-2073254261_i32 = arith.constant -2073254261 : i32
    %22 = vector.broadcast %c-2073254261_i32 : i32 to vector<8x128xi32>
    %23 = arith.muli %21, %22 : vector<8x128xi32>
    %c16_i32_0 = arith.constant 16 : i32
    %24 = vector.broadcast %c16_i32_0 : i32 to vector<8x128xi32>
    %25 = arith.shrui %23, %24 : vector<8x128xi32>
    %26 = arith.xori %23, %25 : vector<8x128xi32>
    %c-2147483648_i32 = arith.constant -2147483648 : i32
    %27 = vector.broadcast %c-2147483648_i32 : i32 to vector<8x128xi32>
    %28 = arith.cmpi ult, %26, %27 : vector<8x128xi32>
    %c0_1 = arith.constant 0 : index
    %c0_2 = arith.constant 0 : index
    %29 = vector.load %arg2[%c0_1, %c0_2] : memref<8x128xf32, #tpu.memory_space<vmem>>, vector<8x128xf32>
    %cst = arith.constant 0.000000e+00 : f32
    %30 = vector.broadcast %cst : f32 to vector<8x128xf32>
    %cst_3 = arith.constant 2.000000e+00 : f32
    %31 = vector.broadcast %cst_3 : f32 to vector<8x128xf32>
    %32 = arith.mulf %29, %31 : vector<8x128xf32>
    %33 = arith.select %28, %30, %32 : vector<8x128xi1>, vector<8x128xf32>
    %c0_4 = arith.constant 0 : index
    %c0_5 = arith.constant 0 : index
    %34 = vector.load %arg3[%c0_4, %c0_5] : memref<8x128xf32, #tpu.memory_space<vmem>>, vector<8x128xf32>
    tpu.vector_store %arg3[%c0_4, %c0_5], %33 {strides = array<i32>} : memref<8x128xf32, #tpu.memory_space<vmem>>, vector<8x128xf32>,
    return
  }
  func.func @transform_0(%arg0: i32) -> i32 {
    %c0_i32 = arith.constant 0 : i32
    %c0_i32_0 = arith.constant 0 : i32
    return %c0_i32 : i32
  }
  func.func @transform_1(%arg0: i32) -> (i32, i32) {
    %c0_i32 = arith.constant 0 : i32
    %c0_i32_0 = arith.constant 0 : i32
    return %arg0, %c0_i32 : i32, i32
  }
  func.func @transform_2(%arg0: i32) -> (i32, i32) {
    %c0_i32 = arith.constant 0 : i32
    %c0_i32_0 = arith.constant 0 : i32
    return %arg0, %c0_i32 : i32, i32
  }
}

</mosaic_0001>

<llo_original>
// kernel: tpu_custom_call.1
$region0: #{tpu_custom_call.1}
  #allocation0 [shape = 'u32[]', space=smem, size = 0x4, offset = 0x4, fixed_abs, tag = 'smem constant byte address 0x4 - core index']
  #allocation1 [shape = 'u32[144,128]{1,0:T(1,128)}', space=vmem, size = 0x12000, scoped, tag = 'internal scratch']
  #allocation2 [shape = 's32[1]{0:T(128)S(6)}', space=smem, size = 0x200, scoped, tag = 'scoped memory for tpu_custom_call.1']
  %s0 = inlined_call_operand.<no memory space> [shape: s32[1], index: 0, kind: input, shape index: {}]
  %s1 = inlined_call_operand.hbm [shape: f32[16,128], index: 1, kind: input, shape index: {}]
  %s2 = inlined_call_operand.hbm [shape: f32[16,128], index: 2, kind: output, shape index: {}]
  %s3 = sld [smem:[#allocation0]]
  $region45: #{tpu_custom_call.1} parent=0
    _
  %s5 = ssub.s32 1, %s3
  %s6 = scalar_select 0, %s5, %s3
  %7 = sst [smem:[#allocation2]] %s0
  $region1: #{tpu_custom_call.1} parent=0
    #allocation3 [shape = 'u8[8192]{0}', space=vmem, size = 0x2000, scoped, tag = 'input window, operand 1']
    #allocation4 [shape = 's32[2]{0}', space=sflag, size = 0x8, scoped, tag = 'scoped memory for tpu_custom_call.1']
    #allocation5 [shape = 's32[2]{0}', space=sflag, size = 0x8, scoped, tag = 'scoped memory for tpu_custom_call.1']
    #allocation6 [shape = 'u8[8192]{0}', space=vmem, size = 0x2000, scoped, tag = 'output window, operand 0']
    %8 = vsyncpa [#allocation4], 0
    %s9 = scalar_lea.sflag [#allocation4], 1
    %10 = vsyncpa %s9, 0
    %11 = vsyncpa [#allocation5], 0
    %s12 = scalar_lea.sflag [#allocation5], 1
    %13 = vsyncpa %s12, 0
    loop: start=0, step=1, limit=4
    $region2: #{tpu_custom_call.1} parent=1 // loop_pre_header
      _
    $region3: #{tpu_custom_call.1} parent=1 // loop_header
      %s15 = sphi 0, %s19
      %p16 = scmp.ge.s32.totalorder %s15, 4
      %s23 = sphi 0, %s23
      %s25 = sphi 0, %s23
      %s26 = sphi 0, %s25
      %s40 = sphi 0, %s26
      %s46 = sphi 0, %s48
      %s49 = sphi 0, %s46
      %s50 = sphi 0, %s49
      %s66 = sphi 0, %s50
      %s72 = sphi 0, %s74
      %s75 = sphi 0, %s72
      %s76 = sphi 0, %s75
      %s92 = sphi 0, %s76
    $region4: #{tpu_custom_call.1} parent=1 // loop_header_branch
      %18 = sbr.rel (%p16) target = $region8
    $region5: #{tpu_custom_call.1} parent=1 // loop_body
      %s20 = ssub.s32 %s15, 1
      %s21 = ssub.s32 %s15, 2
      %s22 = sadd.s32 %s15, 1
      %s24 = sadd.s32 %s23, 1
      %p27 = scmp.eq.s32.totalorder %s15, 1
      %p28 = scmp.ne.s32.totalorder %s23, %s25
      %p29 = scmp.eq.s32.totalorder %s15, 0
      %p30 = por %p28, %p29
      %p31 = scmp.ne.s32.totalorder %s23, %s25
      %p32 = scmp.eq.s32.totalorder %s20, 1
      %p33 = por %p31, %p32
      %p34 = scmp.ne.s32.totalorder %s25, %s26
      %p35 = scmp.eq.s32.totalorder %s20, 0
      %p36 = por %p34, %p35
      %p37 = scmp.ne.s32.totalorder %s25, %s26
      %p38 = scmp.eq.s32.totalorder %s21, 1
      %p39 = por %p37, %p38
      %p41 = scmp.ne.s32.totalorder %s26, %s40
      %p42 = scmp.eq.s32.totalorder %s21, 0
      %p43 = por %p41, %p42
      %s44 = ssub.s32 %s15, %s22
      %p45 = scmp.eq.s32.totalorder %s44, 0
      %s47 = sadd.s32 %s46, 1
      %s48 = scalar_select %p45, %s46, %s47
      %p51 = pneg %p45
      %p52 = scmp.eq.s32.totalorder %s15, 1
      %p53 = por %p51, %p52
      %p54 = scmp.ne.s32.totalorder %s46, %s49
      %p55 = scmp.eq.s32.totalorder %s15, 0
      %p56 = por %p54, %p55
      %p57 = scmp.ne.s32.totalorder %s46, %s49
      %p58 = scmp.eq.s32.totalorder %s20, 1
      %p59 = por %p57, %p58
      %p60 = scmp.ne.s32.totalorder %s49, %s50
      %p61 = scmp.eq.s32.totalorder %s20, 0
      %p62 = por %p60, %p61
      %p63 = scmp.ne.s32.totalorder %s49, %s50
      %p64 = scmp.eq.s32.totalorder %s21, 1
      %p65 = por %p63, %p64
      %p67 = scmp.ne.s32.totalorder %s50, %s66
      %p68 = scmp.eq.s32.totalorder %s21, 0
      %p69 = por %p67, %p68
      %s70 = ssub.s32 %s15, %s22
      %p71 = scmp.eq.s32.totalorder %s70, 0
      %s73 = sadd.s32 %s72, 1
      %s74 = scalar_select %p71, %s72, %s73
      %p77 = pneg %p71
      %p78 = scmp.eq.s32.totalorder %s15, 1
      %p79 = por %p77, %p78
      %p80 = scmp.ne.s32.totalorder %s72, %s75
      %p81 = scmp.eq.s32.totalorder %s15, 0
      %p82 = por %p80, %p81
      %p83 = scmp.ne.s32.totalorder %s72, %s75
      %p84 = scmp.eq.s32.totalorder %s20, 1
      %p85 = por %p83, %p84
      %p86 = scmp.ne.s32.totalorder %s75, %s76
      %p87 = scmp.eq.s32.totalorder %s20, 0
      %p88 = por %p86, %p87
      %p89 = scmp.ne.s32.totalorder %s75, %s76
      %p90 = scmp.eq.s32.totalorder %s21, 1
      %p91 = por %p89, %p90
      %p93 = scmp.ne.s32.totalorder %s76, %s92
      %p94 = scmp.eq.s32.totalorder %s21, 0
      %p95 = por %p93, %p94
      %p96 = scmp.le.s32.totalorder 1, %s15
      %p97 = scmp.lt.s32.totalorder %s15, 3
      %p98 = pnand %p96, %p97
      %p99 = pneg %p98
      // Predicated region
      $region9: #{tpu_custom_call.1} parent=5 // pred_check
        _
      $region10: #{tpu_custom_call.1} parent=5 // pred_check_branch
        %101 = sbr.rel (%p98) target = $region12
      $region11: #{tpu_custom_call.1} parent=5 // pred_region
        %s102 = ssub.s32 %s15, 1
        // Predicated region
        $region13: #{tpu_custom_call.1} parent=11 // pred_check
          %p103 = pneg %p36
        $region14: #{tpu_custom_call.1} parent=11 // pred_check_branch
          %105 = sbr.rel (%p103) target = $region16
        $region15: #{tpu_custom_call.1} parent=11 // pred_region
          _
        $region16: #{tpu_custom_call.1} parent=11 // pred_fallthru
          _
      $region12: #{tpu_custom_call.1} parent=5 // pred_fallthru
        _
      %p106 = scmp.lt.s32.totalorder %s15, 2
      // Predicated region
      $region17: #{tpu_custom_call.1} parent=5 // pred_check
        %p107 = pneg %p106
      $region18: #{tpu_custom_call.1} parent=5 // pred_check_branch
        %109 = sbr.rel (%p107) target = $region20
      $region19: #{tpu_custom_call.1} parent=5 // pred_region
        // Predicated region
        $region21: #{tpu_custom_call.1} parent=19 // pred_check
          %p110 = pneg %p56
        $region22: #{tpu_custom_call.1} parent=19 // pred_check_branch
          %112 = sbr.rel (%p110) target = $region24
        $region23: #{tpu_custom_call.1} parent=19 // pred_region
          %s113 = sand.u32 %s46, 1
          %s114 = scalar_lea.sflag [#allocation4], %s113
          %s115 = sand.u32 %s46, 1
          %s116 = smul.addr %s115, 8
          %s117 = scalar_lea.vmem [#allocation3], %s116
          %s119 = ssub.s32 128, 128
          %120 = vsyncadd %s114, %s119
          %s121 = smul.addr %s15, 128
          %s122 = scalar_lea.hbm %s1, %s121
          %s124 = sshll.u32 %s117, 4
          %s125 = int_to_ptr.vmem [resolvable:$true] %s124
          %127 = dma.hbm_to_vmem [thread:$0]  %s122, 128, %s125, %s114
        $region24: #{tpu_custom_call.1} parent=19 // pred_fallthru
          _
      $region20: #{tpu_custom_call.1} parent=5 // pred_fallthru
        _
      %p128 = scmp.le.s32.totalorder 1, %s15
      %p129 = scmp.lt.s32.totalorder %s15, 3
      %p130 = pnand %p128, %p129
      %p131 = pneg %p130
      // Predicated region
      $region25: #{tpu_custom_call.1} parent=5 // pred_check
        _
      $region26: #{tpu_custom_call.1} parent=5 // pred_check_branch
        %133 = sbr.rel (%p130) target = $region28
      $region27: #{tpu_custom_call.1} parent=5 // pred_region
        %s134 = ssub.s32 %s15, 1
        %s135 = sand.u32 %s49, 1
        %s136 = scalar_lea.sflag [#allocation4], %s135
        %s137 = sand.u32 %s49, 1
        %s138 = smul.addr %s137, 8
        %s139 = scalar_lea.vmem [#allocation3], %s138
        // Predicated region
        $region29: #{tpu_custom_call.1} parent=27 // pred_check
          %p140 = pneg %p62
        $region30: #{tpu_custom_call.1} parent=27 // pred_check_branch
          %142 = sbr.rel (%p140) target = $region32
        $region31: #{tpu_custom_call.1} parent=27 // pred_region
          %143 = dma.done %s136, 128
        $region32: #{tpu_custom_call.1} parent=27 // pred_fallthru
          _
        %p144 = pneg %p36
        %p145 = pneg %p33
        %s146 = sand.u32 %s49, 1
        %s147 = scalar_lea.sflag [#allocation4], %s146
        %s148 = sand.u32 %s49, 1
        %s149 = smul.addr %s148, 8
        %s150 = scalar_lea.vmem [#allocation3], %s149
        %p151 = pneg %p62
        %p152 = pneg %p59
        %p153 = pneg %p88
        %p154 = pneg %p85
        %s155 = sand.u32 %s75, 1
        %s156 = scalar_lea.sflag [#allocation5], %s155
        %s157 = sand.u32 %s75, 1
        %s158 = smul.addr %s157, 8
        %s159 = scalar_lea.vmem [#allocation6], %s158
        %s160 = smul.u32 %s20, 8
        %v161 = vlaneseq
        %v162 = vshrl.u32 %v161, 7
        %v163 = vlaneseq
        %v164 = vand.u32 %v163, 127
        %v165 = vstv %s160
        %v166 = vadd.s32 %v165, %v162
        %v167 = vmul.u32 %v166, 128
        %v168 = vadd.s32 %v167, %v164
        %s169 = sld [smem:[#allocation2]]
        %v170 = vmul.u32 %v168, 2654435761
        %s171 = smul.u32 %s169, 2246822519
        %v172 = vstv %s171
        %v173 = vadd.s32 %v170, %v172
        %v174 = vshrl.u32 %v173, 16
        %v175 = vxor.u32 %v173, %v174
        %v176 = vmul.u32 %v175, 2146121005
        %v177 = vshrl.u32 %v176, 15
        %v178 = vxor.u32 %v176, %v177
        %v179 = vmul.u32 %v178, 2221713035
        %v180 = vshrl.u32 %v179, 16
        %v181 = vxor.u32 %v179, %v180
        %vm182 = vcmp.lt.u32.totalorder %v181, 2147483648
        %v183 = vld [vmem:[%s139] sm:$0xff]
        %v184 = vmul.f32 %v183, 2.0
        %v185 = vsel %vm182, 0.0, %v184
        %186 = vst [vmem:[%s159] sm:$0xff] %v185
        %s187 = sand.u32 %s75, 1
        %s188 = scalar_lea.sflag [#allocation5], %s187
        %s189 = sand.u32 %s75, 1
        %s190 = smul.addr %s189, 8
        %s191 = scalar_lea.vmem [#allocation6], %s190
        // Predicated region
        $region33: #{tpu_custom_call.1} parent=27 // pred_check
          %p192 = pneg %p85
        $region34: #{tpu_custom_call.1} parent=27 // pred_check_branch
          %194 = sbr.rel (%p192) target = $region36
        $region35: #{tpu_custom_call.1} parent=27 // pred_region
          %s196 = ssub.s32 128, 128
          %197 = vsyncadd %s188, %s196
          %s198 = smul.addr %s20, 128
          %s199 = scalar_lea.hbm %s2, %s198
          %s201 = sshll.u32 %s191, 4
          %s202 = int_to_ptr.vmem [resolvable:$true] %s201
          %204 = dma.vmem_to_hbm [thread:$0]  %s202, 128, %s199, %s188
        $region36: #{tpu_custom_call.1} parent=27 // pred_fallthru
          _
      $region28: #{tpu_custom_call.1} parent=5 // pred_fallthru
        _
      %p205 = scmp.le.s32.totalorder 2, %s15
      // Predicated region
      $region37: #{tpu_custom_call.1} parent=5 // pred_check
        %p206 = pneg %p205
      $region38: #{tpu_custom_call.1} parent=5 // pred_check_branch
        %208 = sbr.rel (%p206) target = $region40
      $region39: #{tpu_custom_call.1} parent=5 // pred_region
        %s209 = ssub.s32 %s15, 2
        // Predicated region
        $region41: #{tpu_custom_call.1} parent=39 // pred_check
          %p210 = pneg %p91
        $region42: #{tpu_custom_call.1} parent=39 // pred_check_branch
          %212 = sbr.rel (%p210) target = $region44
        $region43: #{tpu_custom_call.1} parent=39 // pred_region
          %s213 = sand.u32 %s76, 1
          %s214 = scalar_lea.sflag [#allocation5], %s213
          %s215 = sand.u32 %s76, 1
          %s216 = smul.addr %s215, 8
          %s217 = scalar_lea.vmem [#allocation6], %s216
          %218 = dma.done %s214, 128
        $region44: #{tpu_custom_call.1} parent=39 // pred_fallthru
          _
      $region40: #{tpu_custom_call.1} parent=5 // pred_fallthru
        _
    $region6: #{tpu_custom_call.1} parent=1 // loop_footer
      %s19 = sadd.s32 1, %s15
    $region7: #{tpu_custom_call.1} parent=1 // loop_footer_branch
      %14 = sbr.rel target = $region3
    $region8: #{tpu_custom_call.1} parent=1 // loop_exit
      _
    %219 = vsyncpa [#allocation4], 1
    %s220 = scalar_lea.sflag [#allocation4], 1
    %221 = vsyncpa %s220, 1
    %222 = vsyncpa [#allocation5], 1
    %s223 = scalar_lea.sflag [#allocation5], 1
    %224 = vsyncpa %s223, 1

</llo_original>
